<compile_context>
chip_gen: v7x
topology: tpu7x:2x2x1
jax: 0.10.0
libtpu: 0.0.40
codegen_flags: <defaults>
</compile_context>

<pallas_src>
from functools import partial

import jax
import jax.numpy as jnp
from jax.experimental import pallas as pl
from jax.experimental.pallas import tpu as pltpu


def _round_up(n, m):
    return ((n + m - 1) // m) * m


def _mlp_kernel(x_ref, w1_ref, b1_ref, w2_ref, b2_ref, o_ref):
    # x_ref:  (TB, 512)     w1_ref: (512, Hp)   b1_ref: (1, Hp)
    # w2_ref: (Hp, Op)      b2_ref: (1, Op)     o_ref:  (TB, Op)  (f32)
    h = jnp.dot(x_ref[...], w1_ref[...], preferred_element_type=jnp.float32)
    h = jnp.maximum(h + b1_ref[...].astype(jnp.float32), 0.0)   # bias + ReLU
    # Dropout(p=0.0) is an exact identity -> folded away.
    h = h.astype(w2_ref.dtype)  # bf16 (or f32) for the second MXU pass
    y = jnp.dot(h, w2_ref[...], preferred_element_type=jnp.float32)
    o_ref[...] = y + b2_ref[...].astype(jnp.float32)


def prepare_params(w1, b1, w2, b2, param_dtype=jnp.bfloat16):
    """One-time parameter prep.

    Casts to param_dtype and zero-pads the hidden / output dims up to
    multiples of 128 so every MXU tile is lane-dense and the output store is
    an unmasked vst.  Padded w1 columns / w2 rows+cols / biases are zero and
    ReLU(0) = 0, so padded units contribute exactly nothing.
    Returns ((w1p, b1p, w2p, b2p), out_dim).
    """
    in_dim, h_dim = w1.shape
    out_dim = w2.shape[1]
    hp = _round_up(h_dim, 128)
    op = _round_up(out_dim, 128)
    w1p = jnp.zeros((in_dim, hp), param_dtype).at[:, :h_dim].set(w1.astype(param_dtype))
    b1p = jnp.zeros((1, hp), param_dtype).at[0, :h_dim].set(b1.astype(param_dtype))
    w2p = jnp.zeros((hp, op), param_dtype).at[:h_dim, :out_dim].set(w2.astype(param_dtype))
    b2p = jnp.zeros((1, op), param_dtype).at[0, :out_dim].set(b2.astype(param_dtype))
    return (w1p, b1p, w2p, b2p), out_dim


@partial(jax.jit, static_argnames=("block_b",))
def identity_celltype_forward_padded(x, w1p, b1p, w2p, b2p, *, block_b=2048):
    """x: (B, 512); padded params from prepare_params. Returns (B, Op) f32 slab."""
    B, IN = x.shape
    Hp = w1p.shape[1]
    Op = w2p.shape[1]
    param_dtype = w1p.dtype

    # Stream x in the param dtype (bf16 halves the memory-bound x traffic).
    # Producing x in bf16 upstream avoids even this one convert.
    x = x.astype(param_dtype)

    # Batch tile: multiple of 8 (sublane).  The grid uses cdiv so the last
    # block may be partial -- no batch pad copy of x is ever materialized.
    TB = min(block_b, _round_up(B, 8))
    grid = (pl.cdiv(B, TB),)

    cost = pl.CostEstimate(
        flops=2 * B * (IN * Hp + Hp * Op),
        transcendentals=0,
        bytes_accessed=(x.size * x.dtype.itemsize
                        + (w1p.size + b1p.size + w2p.size + b2p.size)
                        * jnp.dtype(param_dtype).itemsize
                        + B * Op * 4),
    )

    return pl.pallas_call(
        _mlp_kernel,
        out_shape=jax.ShapeDtypeStruct((B, Op), jnp.float32),
        grid_spec=pltpu.PrefetchScalarGridSpec(
            num_scalar_prefetch=0,
            grid=grid,
            in_specs=[
                pl.BlockSpec((TB, IN), lambda i: (i, 0)),   # x tile, pipelined over batch
                pl.BlockSpec((IN, Hp), lambda i: (0, 0)),   # w1 (resident across grid)
                pl.BlockSpec((1, Hp), lambda i: (0, 0)),    # b1 (resident)
                pl.BlockSpec((Hp, Op), lambda i: (0, 0)),   # w2 (resident)
                pl.BlockSpec((1, Op), lambda i: (0, 0)),    # b2 (resident)
            ],
            out_specs=pl.BlockSpec((TB, Op), lambda i: (i, 0)),
        ),
        compiler_params=pltpu.CompilerParams(
            # Batch steps are independent; on v7x this lets the grid shard
            # across the 2 TensorCores.  On v5e/v6e it is a no-op.
            dimension_semantics=("parallel",),
        ),
        cost_estimate=cost,
    )(x, w1p, b1p, w2p, b2p)


def identity_celltype_forward(x, params, out_dim, *, block_b=2048):
    """Convenience wrapper returning (B, out_dim).

    Prefer consuming the padded slab from identity_celltype_forward_padded
    directly (or slicing lazily downstream) to avoid this extra slice copy.
    """
    w1p, b1p, w2p, b2p = params
    out = identity_celltype_forward_padded(x, w1p, b1p, w2p, b2p, block_b=block_b)
    return out[:, :out_dim]


def _init_linear(key, fan_in, fan_out, dtype=jnp.float32):
    # Mimics torch.nn.Linear default init: U(-1/sqrt(fan_in), +1/sqrt(fan_in)).
    kw, kb = jax.random.split(key)
    bound = 1.0 / (fan_in ** 0.5)
    w = jax.random.uniform(kw, (fan_in, fan_out), dtype, minval=-bound, maxval=bound)
    b = jax.random.uniform(kb, (fan_out,), dtype, minval=-bound, maxval=bound)
    return w, b


if __name__ == "__main__":
    IN_DIM, H_DIM, OUT_DIM = 512, 100, 10
    BATCH = 8

    key = jax.random.PRNGKey(0)
    kx, k1, k2 = jax.random.split(key, 3)

    x = jax.random.normal(kx, (BATCH, IN_DIM), jnp.float32)
    w1, b1 = _init_linear(k1, IN_DIM, H_DIM)
    w2, b2 = _init_linear(k2, H_DIM, OUT_DIM)

    # --- Default bf16 path (bf16 streaming + MXU, f32 accumulation). ---
    params_bf16, out_dim = prepare_params(w1, b1, w2, b2, param_dtype=jnp.bfloat16)
    y = jax.block_until_ready(identity_celltype_forward(x, params_bf16, out_dim))
    assert y.shape == (BATCH, OUT_DIM)

    # Reference with the same bf16 input rounding (f32 accumulation).
    xb = x.astype(jnp.bfloat16)
    h_ref = jnp.maximum(
        jnp.dot(xb, w1.astype(jnp.bfloat16), preferred_element_type=jnp.float32) + b1, 0.0)
    ref_bf16 = jnp.dot(h_ref.astype(jnp.bfloat16), w2.astype(jnp.bfloat16),
                       preferred_element_type=jnp.float32) + b2
    assert jnp.allclose(y, ref_bf16, atol=2e-2, rtol=2e-2), \
        float(jnp.max(jnp.abs(y - ref_bf16)))

    # --- Full-precision f32 path, with a batch not divisible by tile/sublane. ---
    params_f32, out_dim = prepare_params(w1, b1, w2, b2, param_dtype=jnp.float32)
    x_big = jax.random.normal(kx, (133, IN_DIM), jnp.float32)
    y_big = jax.block_until_ready(identity_celltype_forward(x_big, params_f32, out_dim))
    ref_big = jnp.maximum(x_big @ w1 + b1, 0.0) @ w2 + b2
    assert y_big.shape == (133, OUT_DIM)
    assert jnp.allclose(y_big, ref_big, atol=1e-4, rtol=1e-4), \
        float(jnp.max(jnp.abs(y_big - ref_big)))

    print("KERNEL_OK")
</pallas_src>

<mosaic_0001>
module attributes {stable_mosaic.version = 11 : i64} {
  func.func @_mlp_kernel(%arg0: i32, %arg1: memref<8x512xbf16, #tpu.memory_space<vmem>>, %arg2: memref<512x128xbf16, #tpu.memory_space<vmem>>, %arg3: memref<1x128xbf16, #tpu.memory_space<vmem>>, %arg4: memref<128x128xbf16, #tpu.memory_space<vmem>>, %arg5: memref<1x128xbf16, #tpu.memory_space<vmem>>, %arg6: memref<8x128xf32, #tpu.memory_space<vmem>>) attributes {dimension_semantics = [#tpu.dimension_semantics<parallel>], iteration_bounds = array<i64: 1>, scalar_prefetch = 0 : i64, scratch_operands = 0 : i64, tpu.core_type = #tpu.core_type<tc>, window_params = [{transform_indices = @transform_0, window_bounds = array<i64: 8, 512>}, {pipeline_mode = #tpu.pipeline_mode<synchronous>, transform_indices = @transform_1, window_bounds = array<i64: 512, 128>}, {pipeline_mode = #tpu.pipeline_mode<synchronous>, transform_indices = @transform_2, window_bounds = array<i64: 1, 128>}, {pipeline_mode = #tpu.pipeline_mode<synchronous>, transform_indices = @transform_3, window_bounds = array<i64: 128, 128>}, {pipeline_mode = #tpu.pipeline_mode<synchronous>, transform_indices = @transform_4, window_bounds = array<i64: 1, 128>}, {transform_indices = @transform_5, window_bounds = array<i64: 8, 128>}]} {
    %c0 = arith.constant 0 : index
    %c0_0 = arith.constant 0 : index
    %0 = vector.load %arg1[%c0, %c0_0] : memref<8x512xbf16, #tpu.memory_space<vmem>>, vector<8x512xbf16>
    %c0_1 = arith.constant 0 : index
    %c0_2 = arith.constant 0 : index
    %1 = vector.load %arg2[%c0_1, %c0_2] : memref<512x128xbf16, #tpu.memory_space<vmem>>, vector<512x128xbf16>
    %cst = arith.constant dense<0.000000e+00> : vector<8x128xf32>
    %2 = tpu.matmul %0, %1, %cst {dimension_numbers = #tpu.dot_dimension_numbers<[1], [0], [0], [1], [0, 0, 1, 1], [], []>} : vector<8x512xbf16>, vector<512x128xbf16>, vector<8x128xf32> -> vector<8x128xf32>
    %c0_3 = arith.constant 0 : index
    %c0_4 = arith.constant 0 : index
    %3 = vector.load %arg3[%c0_3, %c0_4] : memref<1x128xbf16, #tpu.memory_space<vmem>>, vector<1x128xbf16>
    %4 = arith.extf %3 : vector<1x128xbf16> to vector<1x128xf32>
    %5 = vector.broadcast %4 : vector<1x128xf32> to vector<8x128xf32>
    %6 = arith.addf %2, %5 : vector<8x128xf32>
    %cst_5 = arith.constant 0.000000e+00 : f32
    %7 = vector.broadcast %cst_5 : f32 to vector<8x128xf32>
    %8 = arith.maximumf %6, %7 : vector<8x128xf32>
    %9 = arith.truncf %8 : vector<8x128xf32> to vector<8x128xbf16>
    %c0_6 = arith.constant 0 : index
    %c0_7 = arith.constant 0 : index
    %10 = vector.load %arg4[%c0_6, %c0_7] : memref<128x128xbf16, #tpu.memory_space<vmem>>, vector<128x128xbf16>
    %cst_8 = arith.constant dense<0.000000e+00> : vector<8x128xf32>
    %11 = tpu.matmul %9, %10, %cst_8 {dimension_numbers = #tpu.dot_dimension_numbers<[1], [0], [0], [1], [0, 0, 1, 1], [], []>} : vector<8x128xbf16>, vector<128x128xbf16>, vector<8x128xf32> -> vector<8x128xf32>
    %c0_9 = arith.constant 0 : index
    %c0_10 = arith.constant 0 : index
    %12 = vector.load %arg5[%c0_9, %c0_10] : memref<1x128xbf16, #tpu.memory_space<vmem>>, vector<1x128xbf16>
    %13 = arith.extf %12 : vector<1x128xbf16> to vector<1x128xf32>
    %14 = vector.broadcast %13 : vector<1x128xf32> to vector<8x128xf32>
    %15 = arith.addf %11, %14 : vector<8x128xf32>
    %c0_11 = arith.constant 0 : index
    %c0_12 = arith.constant 0 : index
    %16 = vector.load %arg6[%c0_11, %c0_12] : memref<8x128xf32, #tpu.memory_space<vmem>>, vector<8x128xf32>
    tpu.vector_store %arg6[%c0_11, %c0_12], %15 {strides = array<i32>} : memref<8x128xf32, #tpu.memory_space<vmem>>, vector<8x128xf32>,
    return
  }
  func.func @transform_0(%arg0: i32) -> (i32, i32) {
    %c0_i32 = arith.constant 0 : i32
    %c0_i32_0 = arith.constant 0 : i32
    return %arg0, %c0_i32 : i32, i32
  }
  func.func @transform_1(%arg0: i32) -> (i32, i32) {
    %c0_i32 = arith.constant 0 : i32
    %c0_i32_0 = arith.constant 0 : i32
    %c0_i32_1 = arith.constant 0 : i32
    return %c0_i32, %c0_i32_0 : i32, i32
  }
  func.func @transform_2(%arg0: i32) -> (i32, i32) {
    %c0_i32 = arith.constant 0 : i32
    %c0_i32_0 = arith.constant 0 : i32
    %c0_i32_1 = arith.constant 0 : i32
    return %c0_i32, %c0_i32_0 : i32, i32
  }
  func.func @transform_3(%arg0: i32) -> (i32, i32) {
    %c0_i32 = arith.constant 0 : i32
    %c0_i32_0 = arith.constant 0 : i32
    %c0_i32_1 = arith.constant 0 : i32
    return %c0_i32, %c0_i32_0 : i32, i32
  }
  func.func @transform_4(%arg0: i32) -> (i32, i32) {
    %c0_i32 = arith.constant 0 : i32
    %c0_i32_0 = arith.constant 0 : i32
    %c0_i32_1 = arith.constant 0 : i32
    return %c0_i32, %c0_i32_0 : i32, i32
  }
  func.func @transform_5(%arg0: i32) -> (i32, i32) {
    %c0_i32 = arith.constant 0 : i32
    %c0_i32_0 = arith.constant 0 : i32
    return %arg0, %c0_i32 : i32, i32
  }
}

</mosaic_0001>

<llo_original>
// kernel: identity_celltype_forward_padded.1
$region0: #{identity_celltype_forward_padded.1}
  #allocation0 [shape = 'u32[]', space=smem, size = 0x4, offset = 0x4, fixed_abs, tag = 'smem constant byte address 0x4 - core index']
  #allocation1 [shape = 'u32[144,128]{1,0:T(1,128)}', space=vmem, size = 0x12000, scoped, tag = 'internal scratch']
  %s0 = inlined_call_operand.vmem [shape: bf16[8,512], index: 0, kind: input, shape index: {}]
  %s1 = inlined_call_operand.hbm [shape: bf16[512,128], index: 1, kind: input, shape index: {}]
  %s2 = inlined_call_operand.vmem [shape: bf16[1,128], index: 2, kind: input, shape index: {}]
  %s3 = inlined_call_operand.hbm [shape: bf16[128,128], index: 3, kind: input, shape index: {}]
  %s4 = inlined_call_operand.vmem [shape: bf16[1,128], index: 4, kind: input, shape index: {}]
  %s5 = inlined_call_operand.hbm [shape: f32[8,128], index: 5, kind: output, shape index: {}]
  %s6 = sld [smem:[#allocation0]]
  $region38: #{identity_celltype_forward_padded.1} parent=0
    _
  %s8 = ssub.s32 1, %s6
  %s9 = scalar_select 0, %s8, %s6
  $region1: #{identity_celltype_forward_padded.1} parent=0
    #allocation2 [shape = 'u8[131072]{0}', space=vmem, size = 0x20000, scoped, tag = 'input window, operand 1, single buffered']
    #allocation3 [shape = 's32[1]{0}', space=sflag, size = 0x4, scoped, tag = 'scoped memory for identity_celltype_forward_padded.1']
    #allocation4 [shape = 's32[1]{0}', space=sflag, size = 0x4, scoped, tag = 'scoped memory for identity_celltype_forward_padded.1']
    #allocation5 [shape = 'u8[32768]{0}', space=vmem, size = 0x8000, scoped, tag = 'input window, operand 3, single buffered']
    #allocation6 [shape = 's32[1]{0}', space=sflag, size = 0x4, scoped, tag = 'scoped memory for identity_celltype_forward_padded.1']
    #allocation7 [shape = 'u8[4096]{0}', space=vmem, size = 0x1000, scoped, tag = 'output window, operand 0, single buffered']
    %10 = vsyncpa [#allocation3], 0
    %11 = vsyncpa [#allocation6], 0
    %12 = vsyncpa [#allocation4], 0
    // Predicated region
    $region2: #{identity_celltype_forward_padded.1} parent=1 // pred_check
      _
    $region3: #{identity_celltype_forward_padded.1} parent=1 // pred_check_branch
      %14 = sbr.rel (0) target = $region5
    $region4: #{identity_celltype_forward_padded.1} parent=1 // pred_region
      _
    $region5: #{identity_celltype_forward_padded.1} parent=1 // pred_fallthru
      _
    // Predicated region
    $region6: #{identity_celltype_forward_padded.1} parent=1 // pred_check
      _
    $region7: #{identity_celltype_forward_padded.1} parent=1 // pred_check_branch
      %16 = sbr.rel (0) target = $region9
    $region8: #{identity_celltype_forward_padded.1} parent=1 // pred_region
      %s18 = ssub.s32 4096, 4096
      %19 = vsyncadd [#allocation3], %s18
      %s20 = sshll.u32 [#allocation2], 4
      %s21 = int_to_ptr.vmem [resolvable:$true] %s20
      %26 = dma.hbm_to_vmem [thread:$0]  %s1, 4096, %s21, [#allocation3], 64, 64, 4
    $region9: #{identity_celltype_forward_padded.1} parent=1 // pred_fallthru
      _
    // Predicated region
    $region10: #{identity_celltype_forward_padded.1} parent=1 // pred_check
      _
    $region11: #{identity_celltype_forward_padded.1} parent=1 // pred_check_branch
      %28 = sbr.rel (0) target = $region13
    $region12: #{identity_celltype_forward_padded.1} parent=1 // pred_region
      _
    $region13: #{identity_celltype_forward_padded.1} parent=1 // pred_fallthru
      _
    // Predicated region
    $region14: #{identity_celltype_forward_padded.1} parent=1 // pred_check
      _
    $region15: #{identity_celltype_forward_padded.1} parent=1 // pred_check_branch
      %30 = sbr.rel (0) target = $region17
    $region16: #{identity_celltype_forward_padded.1} parent=1 // pred_region
      %s32 = ssub.s32 1024, 1024
      %33 = vsyncadd [#allocation6], %s32
      %s34 = sshll.u32 [#allocation5], 4
      %s35 = int_to_ptr.vmem [resolvable:$true] %s34
      %40 = dma.hbm_to_vmem [thread:$0]  %s3, 1024, %s35, [#allocation6], 64, 64, 4
    $region17: #{identity_celltype_forward_padded.1} parent=1 // pred_fallthru
      _
    // Predicated region
    $region18: #{identity_celltype_forward_padded.1} parent=1 // pred_check
      _
    $region19: #{identity_celltype_forward_padded.1} parent=1 // pred_check_branch
      %42 = sbr.rel (0) target = $region21
    $region20: #{identity_celltype_forward_padded.1} parent=1 // pred_region
      _
    $region21: #{identity_celltype_forward_padded.1} parent=1 // pred_fallthru
      _
    // Predicated region
    $region22: #{identity_celltype_forward_padded.1} parent=1 // pred_check
      _
    $region23: #{identity_celltype_forward_padded.1} parent=1 // pred_check_branch
      %44 = sbr.rel (0) target = $region25
    $region24: #{identity_celltype_forward_padded.1} parent=1 // pred_region
      %45 = dma.done [#allocation3], 4096
    $region25: #{identity_celltype_forward_padded.1} parent=1 // pred_fallthru
      _
    // Predicated region
    $region26: #{identity_celltype_forward_padded.1} parent=1 // pred_check
      _
    $region27: #{identity_celltype_forward_padded.1} parent=1 // pred_check_branch
      %47 = sbr.rel (0) target = $region29
    $region28: #{identity_celltype_forward_padded.1} parent=1 // pred_region
      %48 = dma.done [#allocation6], 1024
    $region29: #{identity_celltype_forward_padded.1} parent=1 // pred_fallthru
      _
    %v50 = vld [vmem:[%s0] sm:$0xff]
    %v51 = vld [vmem:[%s0 + $0x8] sm:$0xff]
    %v52 = vld [vmem:[#allocation2] sm:$0xf]
    %v53 = vld [vmem:[#allocation2 + $0x4] sm:$0xf]
    %v54 = vld [vmem:[#allocation2 + $0x8] sm:$0xf]
    %v55 = vld [vmem:[#allocation2 + $0xc] sm:$0xf]
    %v56 = vld [vmem:[#allocation2 + $0x10] sm:$0xf]
    %v57 = vld [vmem:[#allocation2 + $0x14] sm:$0xf]
    %v58 = vld [vmem:[#allocation2 + $0x18] sm:$0xf]
    %v59 = vld [vmem:[#allocation2 + $0x1c] sm:$0xf]
    %v60 = vld [vmem:[#allocation2 + $0x20] sm:$0xf]
    %v61 = vld [vmem:[#allocation2 + $0x24] sm:$0xf]
    %v62 = vld [vmem:[#allocation2 + $0x28] sm:$0xf]
    %v63 = vld [vmem:[#allocation2 + $0x2c] sm:$0xf]
    %v64 = vld [vmem:[#allocation2 + $0x30] sm:$0xf]
    %v65 = vld [vmem:[#allocation2 + $0x34] sm:$0xf]
    %v66 = vld [vmem:[#allocation2 + $0x38] sm:$0xf]
    %v67 = vld [vmem:[#allocation2 + $0x3c] sm:$0xf]
    %v68 = vld [vmem:[#allocation2 + $0x40] sm:$0xf]
    %v69 = vld [vmem:[#allocation2 + $0x44] sm:$0xf]
    %v70 = vld [vmem:[#allocation2 + $0x48] sm:$0xf]
    %v71 = vld [vmem:[#allocation2 + $0x4c] sm:$0xf]
    %v72 = vld [vmem:[#allocation2 + $0x50] sm:$0xf]
    %v73 = vld [vmem:[#allocation2 + $0x54] sm:$0xf]
    %v74 = vld [vmem:[#allocation2 + $0x58] sm:$0xf]
    %v75 = vld [vmem:[#allocation2 + $0x5c] sm:$0xf]
    %v76 = vld [vmem:[#allocation2 + $0x60] sm:$0xf]
    %v77 = vld [vmem:[#allocation2 + $0x64] sm:$0xf]
    %v78 = vld [vmem:[#allocation2 + $0x68] sm:$0xf]
    %v79 = vld [vmem:[#allocation2 + $0x6c] sm:$0xf]
    %v80 = vld [vmem:[#allocation2 + $0x70] sm:$0xf]
    %v81 = vld [vmem:[#allocation2 + $0x74] sm:$0xf]
    %v82 = vld [vmem:[#allocation2 + $0x78] sm:$0xf]
    %v83 = vld [vmem:[#allocation2 + $0x7c] sm:$0xf]
    %v84 = vld [vmem:[#allocation2 + $0x80] sm:$0xf]
    %v85 = vld [vmem:[#allocation2 + $0x84] sm:$0xf]
    %v86 = vld [vmem:[#allocation2 + $0x88] sm:$0xf]
    %v87 = vld [vmem:[#allocation2 + $0x8c] sm:$0xf]
    %v88 = vld [vmem:[#allocation2 + $0x90] sm:$0xf]
    %v89 = vld [vmem:[#allocation2 + $0x94] sm:$0xf]
    %v90 = vld [vmem:[#allocation2 + $0x98] sm:$0xf]
    %v91 = vld [vmem:[#allocation2 + $0x9c] sm:$0xf]
    %v92 = vld [vmem:[#allocation2 + $0xa0] sm:$0xf]
    %v93 = vld [vmem:[#allocation2 + $0xa4] sm:$0xf]
    %v94 = vld [vmem:[#allocation2 + $0xa8] sm:$0xf]
    %v95 = vld [vmem:[#allocation2 + $0xac] sm:$0xf]
    %v96 = vld [vmem:[#allocation2 + $0xb0] sm:$0xf]
    %v97 = vld [vmem:[#allocation2 + $0xb4] sm:$0xf]
    %v98 = vld [vmem:[#allocation2 + $0xb8] sm:$0xf]
    %v99 = vld [vmem:[#allocation2 + $0xbc] sm:$0xf]
    %v100 = vld [vmem:[#allocation2 + $0xc0] sm:$0xf]
    %v101 = vld [vmem:[#allocation2 + $0xc4] sm:$0xf]
    %v102 = vld [vmem:[#allocation2 + $0xc8] sm:$0xf]
    %v103 = vld [vmem:[#allocation2 + $0xcc] sm:$0xf]
    %v104 = vld [vmem:[#allocation2 + $0xd0] sm:$0xf]
    %v105 = vld [vmem:[#allocation2 + $0xd4] sm:$0xf]
    %v106 = vld [vmem:[#allocation2 + $0xd8] sm:$0xf]
    %v107 = vld [vmem:[#allocation2 + $0xdc] sm:$0xf]
    %v108 = vld [vmem:[#allocation2 + $0xe0] sm:$0xf]
    %v109 = vld [vmem:[#allocation2 + $0xe4] sm:$0xf]
    %v110 = vld [vmem:[#allocation2 + $0xe8] sm:$0xf]
    %v111 = vld [vmem:[#allocation2 + $0xec] sm:$0xf]
    %v112 = vld [vmem:[#allocation2 + $0xf0] sm:$0xf]
    %v113 = vld [vmem:[#allocation2 + $0xf4] sm:$0xf]
    %v114 = vld [vmem:[#allocation2 + $0xf8] sm:$0xf]
    %v115 = vld [vmem:[#allocation2 + $0xfc] sm:$0xf]
    %v116 = vld [vmem:[%s2] sm:$0x1]
    %v117 = vunpack.c.l.bf16 %v116
    %v118 = vlaneseq
    %v119 = vshrl.u32 %v118, 7
    %v120 = vsub.s32 0, %v119
    %v121 = vrot.slane %v117, %v120
    %v124 = vunpack.c.l.b16 %v50
    %v125 = vunpack.c.h.b16 %v50
    %v126 = vunpack.c.l.b16 %v51
    %v127 = vunpack.c.h.b16 %v51
    %v128 = vpack.c.b16 %v124, %v124
    %v129 = vpack.c.b16 %v125, %v125
    %v130 = vpack.c.b16 %v126, %v126
    %v131 = vpack.c.b16 %v127, %v127
    %v200 = vunpack.c.l.b16 %v52
    %v201 = vunpack.c.l.b16 %v53
    %v202 = vunpack.c.l.b16 %v54
    %v203 = vunpack.c.l.b16 %v55
    %v204 = vunpack.c.l.b16 %v56
    %v205 = vunpack.c.l.b16 %v57
    %v206 = vunpack.c.l.b16 %v58
    %v207 = vunpack.c.l.b16 %v59
    %v208 = vunpack.c.l.b16 %v60
    %v209 = vunpack.c.l.b16 %v61
    %v210 = vunpack.c.l.b16 %v62
    %v211 = vunpack.c.l.b16 %v63
    %v212 = vunpack.c.l.b16 %v64
    %v213 = vunpack.c.l.b16 %v65
    %v214 = vunpack.c.l.b16 %v66
    %v215 = vunpack.c.l.b16 %v67
    %v216 = vunpack.c.l.b16 %v68
    %v217 = vunpack.c.l.b16 %v69
    %v218 = vunpack.c.l.b16 %v70
    %v219 = vunpack.c.l.b16 %v71
    %v220 = vunpack.c.l.b16 %v72
    %v221 = vunpack.c.l.b16 %v73
    %v222 = vunpack.c.l.b16 %v74
    %v223 = vunpack.c.l.b16 %v75
    %v224 = vunpack.c.l.b16 %v76
    %v225 = vunpack.c.l.b16 %v77
    %v226 = vunpack.c.l.b16 %v78
    %v227 = vunpack.c.l.b16 %v79
    %v228 = vunpack.c.l.b16 %v80
    %v229 = vunpack.c.l.b16 %v81
    %v230 = vunpack.c.l.b16 %v82
    %v231 = vunpack.c.l.b16 %v83
    %v232 = vunpack.c.l.b16 %v84
    %v233 = vunpack.c.l.b16 %v85
    %v234 = vunpack.c.l.b16 %v86
    %v235 = vunpack.c.l.b16 %v87
    %v236 = vunpack.c.l.b16 %v88
    %v237 = vunpack.c.l.b16 %v89
    %v238 = vunpack.c.l.b16 %v90
    %v239 = vunpack.c.l.b16 %v91
    %v240 = vunpack.c.l.b16 %v92
    %v241 = vunpack.c.l.b16 %v93
    %v242 = vunpack.c.l.b16 %v94
    %v243 = vunpack.c.l.b16 %v95
    %v244 = vunpack.c.l.b16 %v96
    %v245 = vunpack.c.l.b16 %v97
    %v246 = vunpack.c.l.b16 %v98
    %v247 = vunpack.c.l.b16 %v99
    %v248 = vunpack.c.l.b16 %v100
    %v249 = vunpack.c.l.b16 %v101
    %v250 = vunpack.c.l.b16 %v102
    %v251 = vunpack.c.l.b16 %v103
    %v252 = vunpack.c.l.b16 %v104
    %v253 = vunpack.c.l.b16 %v105
    %v254 = vunpack.c.l.b16 %v106
    %v255 = vunpack.c.l.b16 %v107
    %v256 = vunpack.c.l.b16 %v108
    %v257 = vunpack.c.l.b16 %v109
    %v258 = vunpack.c.l.b16 %v110
    %v259 = vunpack.c.l.b16 %v111
    %v260 = vunpack.c.l.b16 %v112
    %v261 = vunpack.c.l.b16 %v113
    %v262 = vunpack.c.l.b16 %v114
    %v263 = vunpack.c.l.b16 %v115
    %v264 = vpack.c.b16 %v201, %v200
    %v265 = vpack.c.b16 %v203, %v202
    %v266 = vpack.c.b16 %v205, %v204
    %v267 = vpack.c.b16 %v207, %v206
    %v268 = vpack.c.b16 %v209, %v208
    %v269 = vpack.c.b16 %v211, %v210
    %v270 = vpack.c.b16 %v213, %v212
    %v271 = vpack.c.b16 %v215, %v214
    %v272 = vpack.c.b16 %v217, %v216
    %v273 = vpack.c.b16 %v219, %v218
    %v274 = vpack.c.b16 %v221, %v220
    %v275 = vpack.c.b16 %v223, %v222
    %v276 = vpack.c.b16 %v225, %v224
    %v277 = vpack.c.b16 %v227, %v226
    %v278 = vpack.c.b16 %v229, %v228
    %v279 = vpack.c.b16 %v231, %v230
    %v280 = vpack.c.b16 %v233, %v232
    %v281 = vpack.c.b16 %v235, %v234
    %v282 = vpack.c.b16 %v237, %v236
    %v283 = vpack.c.b16 %v239, %v238
    %v284 = vpack.c.b16 %v241, %v240
    %v285 = vpack.c.b16 %v243, %v242
    %v286 = vpack.c.b16 %v245, %v244
    %v287 = vpack.c.b16 %v247, %v246
    %v288 = vpack.c.b16 %v249, %v248
    %v289 = vpack.c.b16 %v251, %v250
    %v290 = vpack.c.b16 %v253, %v252
    %v291 = vpack.c.b16 %v255, %v254
    %v292 = vpack.c.b16 %v257, %v256
    %v293 = vpack.c.b16 %v259, %v258
    %v294 = vpack.c.b16 %v261, %v260
    %v295 = vpack.c.b16 %v263, %v262
    %328 = vmatprep.subr.bf16.mxu0 0
    %329 = vmatpush1.bf16.msra.mxu0 %v264
    %330 = vmatprep.subr.bf16.mxu0 0
    %331 = vmatpush1.bf16.msra.mxu0 %v265
    %332 = vmatprep.subr.bf16.mxu0 0
    %333 = vmatpush1.bf16.msra.mxu0 %v266
    %334 = vmatprep.subr.bf16.mxu0 0
    %335 = vmatpush1.bf16.msra.mxu0 %v267
    %336 = vmatprep.subr.bf16.mxu0 0
    %337 = vmatpush1.bf16.msra.mxu0 %v268
    %338 = vmatprep.subr.bf16.mxu0 0
    %339 = vmatpush1.bf16.msra.mxu0 %v269
    %340 = vmatprep.subr.bf16.mxu0 0
    %341 = vmatpush1.bf16.msra.mxu0 %v270
    %342 = vmatprep.subr.bf16.mxu0 0
    %343 = vmatpush1.bf16.msra.mxu0 %v271
    %344 = vmatprep.subr.bf16.mxu0 0
    %345 = vmatpush1.bf16.msra.mxu0 %v272
    %346 = vmatprep.subr.bf16.mxu0 0
    %347 = vmatpush1.bf16.msra.mxu0 %v273
    %348 = vmatprep.subr.bf16.mxu0 0
    %349 = vmatpush1.bf16.msra.mxu0 %v274
    %350 = vmatprep.subr.bf16.mxu0 0
    %351 = vmatpush1.bf16.msra.mxu0 %v275
    %352 = vmatprep.subr.bf16.mxu0 0
    %353 = vmatpush1.bf16.msra.mxu0 %v276
    %354 = vmatprep.subr.bf16.mxu0 0
    %355 = vmatpush1.bf16.msra.mxu0 %v277
    %356 = vmatprep.subr.bf16.mxu0 0
    %357 = vmatpush1.bf16.msra.mxu0 %v278
    %358 = vmatprep.subr.bf16.mxu0 0
    %359 = vmatpush1.bf16.msra.mxu0 %v279
    %360 = vmatprep.mubr.bf16.mxu0 %v129
    %361 = vmatmul.mubr.bf16.gmra.mrb[0].mxu0 %v128
    %v362 = vpop.f32.mrb[0].mxu0
    %v363 = vadd.f32 %v121, %v362
    %v364 = vpop.f32.mrb[0].mxu0
    %v365 = vpop.f32.mrb[0].mxu0
    %v366 = vpop.f32.mrb[0].mxu0
    %367 = vdwg.mxu0
    %368 = vmatprep.subr.bf16.mxu0 0
    %369 = vmatpush1.bf16.msra.mxu0 %v280
    %370 = vmatprep.subr.bf16.mxu0 0
    %371 = vmatpush1.bf16.msra.mxu0 %v281
    %372 = vmatprep.subr.bf16.mxu0 0
    %373 = vmatpush1.bf16.msra.mxu0 %v282
    %374 = vmatprep.subr.bf16.mxu0 0
    %375 = vmatpush1.bf16.msra.mxu0 %v283
    %376 = vmatprep.subr.bf16.mxu0 0
    %377 = vmatpush1.bf16.msra.mxu0 %v284
    %378 = vmatprep.subr.bf16.mxu0 0
    %379 = vmatpush1.bf16.msra.mxu0 %v285
    %380 = vmatprep.subr.bf16.mxu0 0
    %381 = vmatpush1.bf16.msra.mxu0 %v286
    %382 = vmatprep.subr.bf16.mxu0 0
    %383 = vmatpush1.bf16.msra.mxu0 %v287
    %384 = vmatprep.subr.bf16.mxu0 0
    %385 = vmatpush1.bf16.msra.mxu0 %v288
    %386 = vmatprep.subr.bf16.mxu0 0
    %387 = vmatpush1.bf16.msra.mxu0 %v289
    %388 = vmatprep.subr.bf16.mxu0 0
    %389 = vmatpush1.bf16.msra.mxu0 %v290
    %390 = vmatprep.subr.bf16.mxu0 0
    %391 = vmatpush1.bf16.msra.mxu0 %v291
    %392 = vmatprep.subr.bf16.mxu0 0
    %393 = vmatpush1.bf16.msra.mxu0 %v292
    %394 = vmatprep.subr.bf16.mxu0 0
    %395 = vmatpush1.bf16.msra.mxu0 %v293
    %396 = vmatprep.subr.bf16.mxu0 0
    %397 = vmatpush1.bf16.msra.mxu0 %v294
    %398 = vmatprep.subr.bf16.mxu0 0
    %399 = vmatpush1.bf16.msra.mxu0 %v295
    %400 = vmatprep.mubr.bf16.mxu0 %v131
    %401 = vmatmul.mubr.bf16.gmra.mrb[0].mxu0 %v130
    %v402 = vpop.f32.mrb[0].mxu0
    %v403 = vadd.f32 %v363, %v402
    %v404 = vpop.f32.mrb[0].mxu0
    %v405 = vpop.f32.mrb[0].mxu0
    %v406 = vpop.f32.mrb[0].mxu0
    %407 = vdwg.mxu0
    %v408 = vmax.f32 %v403, 0.0
    %v409 = vpack.c.bf16 %v408, %v408
    %v410 = vld [vmem:[#allocation5] sm:$0xf]
    %v411 = vld [vmem:[#allocation5 + $0x4] sm:$0xf]
    %v412 = vld [vmem:[#allocation5 + $0x8] sm:$0xf]
    %v413 = vld [vmem:[#allocation5 + $0xc] sm:$0xf]
    %v414 = vld [vmem:[#allocation5 + $0x10] sm:$0xf]
    %v415 = vld [vmem:[#allocation5 + $0x14] sm:$0xf]
    %v416 = vld [vmem:[#allocation5 + $0x18] sm:$0xf]
    %v417 = vld [vmem:[#allocation5 + $0x1c] sm:$0xf]
    %v418 = vld [vmem:[#allocation5 + $0x20] sm:$0xf]
    %v419 = vld [vmem:[#allocation5 + $0x24] sm:$0xf]
    %v420 = vld [vmem:[#allocation5 + $0x28] sm:$0xf]
    %v421 = vld [vmem:[#allocation5 + $0x2c] sm:$0xf]
    %v422 = vld [vmem:[#allocation5 + $0x30] sm:$0xf]
    %v423 = vld [vmem:[#allocation5 + $0x34] sm:$0xf]
    %v424 = vld [vmem:[#allocation5 + $0x38] sm:$0xf]
    %v425 = vld [vmem:[#allocation5 + $0x3c] sm:$0xf]
    %v426 = vld [vmem:[%s4] sm:$0x1]
    %v427 = vunpack.c.l.bf16 %v426
    %v428 = vlaneseq
    %v429 = vshrl.u32 %v428, 7
    %v430 = vsub.s32 0, %v429
    %v431 = vrot.slane %v427, %v430
    %v448 = vunpack.c.l.b16 %v410
    %v449 = vunpack.c.l.b16 %v411
    %v450 = vunpack.c.l.b16 %v412
    %v451 = vunpack.c.l.b16 %v413
    %v452 = vunpack.c.l.b16 %v414
    %v453 = vunpack.c.l.b16 %v415
    %v454 = vunpack.c.l.b16 %v416
    %v455 = vunpack.c.l.b16 %v417
    %v456 = vunpack.c.l.b16 %v418
    %v457 = vunpack.c.l.b16 %v419
    %v458 = vunpack.c.l.b16 %v420
    %v459 = vunpack.c.l.b16 %v421
    %v460 = vunpack.c.l.b16 %v422
    %v461 = vunpack.c.l.b16 %v423
    %v462 = vunpack.c.l.b16 %v424
    %v463 = vunpack.c.l.b16 %v425
    %v464 = vpack.c.b16 %v449, %v448
    %v465 = vpack.c.b16 %v451, %v450
    %v466 = vpack.c.b16 %v453, %v452
    %v467 = vpack.c.b16 %v455, %v454
    %v468 = vpack.c.b16 %v457, %v456
    %v469 = vpack.c.b16 %v459, %v458
    %v470 = vpack.c.b16 %v461, %v460
    %v471 = vpack.c.b16 %v463, %v462
    %480 = vmatprep.subr.bf16.mxu0 0
    %481 = vmatpush1.bf16.msra.mxu0 %v464
    %482 = vmatprep.subr.bf16.mxu0 0
    %483 = vmatpush1.bf16.msra.mxu0 %v465
    %484 = vmatprep.subr.bf16.mxu0 0
    %485 = vmatpush1.bf16.msra.mxu0 %v466
    %486 = vmatprep.subr.bf16.mxu0 0
    %487 = vmatpush1.bf16.msra.mxu0 %v467
    %488 = vmatprep.subr.bf16.mxu0 0
    %489 = vmatpush1.bf16.msra.mxu0 %v468
    %490 = vmatprep.subr.bf16.mxu0 0
    %491 = vmatpush1.bf16.msra.mxu0 %v469
    %492 = vmatprep.subr.bf16.mxu0 0
    %493 = vmatpush1.bf16.msra.mxu0 %v470
    %494 = vmatprep.subr.bf16.mxu0 0
    %495 = vmatpush1.bf16.msra.mxu0 %v471
    %496 = vmatprep.subr.bf16.mxu0 0
    %497 = vmatpush1.bf16.msra.mxu0 0
    %498 = vmatprep.subr.bf16.mxu0 0
    %499 = vmatpush1.bf16.msra.mxu0 0
    %500 = vmatprep.subr.bf16.mxu0 0
    %501 = vmatpush1.bf16.msra.mxu0 0
    %502 = vmatprep.subr.bf16.mxu0 0
    %503 = vmatpush1.bf16.msra.mxu0 0
    %504 = vmatprep.subr.bf16.mxu0 0
    %505 = vmatpush1.bf16.msra.mxu0 0
    %506 = vmatprep.subr.bf16.mxu0 0
    %507 = vmatpush1.bf16.msra.mxu0 0
    %508 = vmatprep.subr.bf16.mxu0 0
    %509 = vmatpush1.bf16.msra.mxu0 0
    %510 = vmatprep.subr.bf16.mxu0 0
    %511 = vmatpush1.bf16.msra.mxu0 0
    %512 = vmatprep.mubr.bf16.mxu0 0
    %513 = vmatmul.mubr.bf16.gmra.mrb[0].mxu0 %v409
    %v514 = vpop.f32.mrb[0].mxu0
    %v515 = vadd.f32 %v431, %v514
    %v516 = vpop.f32.mrb[0].mxu0
    %v517 = vpop.f32.mrb[0].mxu0
    %v518 = vpop.f32.mrb[0].mxu0
    %519 = vdwg.mxu0
    %520 = vst [vmem:[#allocation7] sm:$0xff] %v515
    // Predicated region
    $region30: #{identity_celltype_forward_padded.1} parent=1 // pred_check
      _
    $region31: #{identity_celltype_forward_padded.1} parent=1 // pred_check_branch
      %522 = sbr.rel (0) target = $region33
    $region32: #{identity_celltype_forward_padded.1} parent=1 // pred_region
      %s524 = ssub.s32 128, 128
      %525 = vsyncadd [#allocation4], %s524
      %s527 = sshll.u32 [#allocation7], 4
      %s528 = int_to_ptr.vmem [resolvable:$true] %s527
      %530 = dma.vmem_to_hbm [thread:$0]  %s528, 128, %s5, [#allocation4]
    $region33: #{identity_celltype_forward_padded.1} parent=1 // pred_fallthru
      _
    // Predicated region
    $region34: #{identity_celltype_forward_padded.1} parent=1 // pred_check
      _
    $region35: #{identity_celltype_forward_padded.1} parent=1 // pred_check_branch
      %532 = sbr.rel (0) target = $region37
    $region36: #{identity_celltype_forward_padded.1} parent=1 // pred_region
      %533 = dma.done [#allocation4], 128
    $region37: #{identity_celltype_forward_padded.1} parent=1 // pred_fallthru
      _
    %534 = vsyncpa [#allocation3], 1
    %535 = vsyncpa [#allocation6], 1
    %536 = vsyncpa [#allocation4], 1

</llo_original>
